<compile_context>
chip_gen: v7x
topology: tpu7x:2x2x1
jax: 0.10.0
libtpu: 0.0.40
codegen_flags: <defaults>
</compile_context>

<pallas_src>
import math
import functools

import jax
import jax.numpy as jnp
from jax.experimental import pallas as pl
from jax.experimental.pallas import tpu as pltpu

DEFAULT_TOKENS_PER_BLOCK = 256  # tokens gathered per grid step
LANE = 128
SUBLANE = 8


def _round_up(x, m):
    return ((x + m - 1) // m) * m


def embedding_kernel(ids_ref, emb_ref, o_ref, *, scale, vocab):
    """One block of the embedding gather.

    ids_ref : VMEM (1, tokens_per_block, 1) int32   -- token ids for this block
    emb_ref : VMEM (vocab_pad, d_model_pad) f32     -- padded table, resident
    o_ref   : VMEM (tokens_per_block, d_model_pad) f32
    """
    tpb = o_ref.shape[0]
    v_pad = emb_ref.shape[0]

    ids = ids_ref[0]                                  # (tpb, 1) int32
    ids = jnp.clip(ids, 0, vocab - 1)                 # guard OOB / padded ids

    # One-hot gather on the MXU: (tpb, v_pad) @ (v_pad, d_pad) -> (tpb, d_pad).
    col = jax.lax.broadcasted_iota(jnp.int32, (tpb, v_pad), 1)
    onehot = (ids == col).astype(emb_ref.dtype)       # exact 0.0 / 1.0
    rows = jnp.dot(
        onehot,
        emb_ref[...],
        preferred_element_type=jnp.float32,
        precision=jax.lax.Precision.HIGHEST,          # keep the f32 gather exact
    )
    # Single tile-wide scale multiply (matches PyTorch `emb(x) * sqrt(d_model)`).
    o_ref[...] = (rows * scale).astype(o_ref.dtype)


def embedding_forward(ids, table, tokens_per_block=DEFAULT_TOKENS_PER_BLOCK):
    """ids: (B, S) int32, table: (vocab, d_model) f32 -> (B, S, d_model) f32."""
    b, s = ids.shape
    vocab, d_model = table.shape
    num_tokens = b * s
    scale = math.sqrt(d_model)

    # Pad table to MXU / lane-dense shapes: last dim multiple of 128 (unmasked
    # vst on the output), contraction dim multiple of 128.
    d_pad = _round_up(d_model, LANE)
    v_pad = _round_up(vocab, LANE)
    table_p = jnp.pad(table, ((0, v_pad - vocab), (0, d_pad - d_model)))

    # TODO(synk): for large vocabularies (table >> VMEM) switch the table to
    # memory_space=pl.ANY (HBM) and gather only the needed rows per block with
    # a manual double-buffered pltpu.make_async_copy instead of the
    # VMEM-resident one-hot path used here.
    assert v_pad * d_pad * table_p.dtype.itemsize <= 8 * 1024 * 1024, (
        "embedding table too large for the VMEM-resident one-hot gather path")

    # Don't over-block tiny problems: shrink the block to the (8-aligned)
    # token count if that is smaller than the default block size.
    tpb = min(tokens_per_block, _round_up(num_tokens, SUBLANE))
    tpb = _round_up(tpb, SUBLANE)
    n_tok_pad = _round_up(num_tokens, tpb)
    n_blocks = n_tok_pad // tpb

    ids_flat = ids.reshape(-1).astype(jnp.int32)
    ids_flat = jnp.pad(ids_flat, (0, n_tok_pad - num_tokens))  # pad with id 0
    ids_blk = ids_flat.reshape(n_blocks, tpb, 1)

    kernel = functools.partial(embedding_kernel, scale=scale, vocab=vocab)

    out_pad = pl.pallas_call(
        kernel,
        out_shape=jax.ShapeDtypeStruct((n_tok_pad, d_pad), table.dtype),
        grid_spec=pltpu.PrefetchScalarGridSpec(
            num_scalar_prefetch=0,
            grid=(n_blocks,),
            in_specs=[
                # Per-block token ids: tiny VMEM tile, SMEM stays untouched.
                pl.BlockSpec((1, tpb, 1), lambda i: (i, 0, 0)),
                # Padded table: same block every step -> stays resident in VMEM.
                pl.BlockSpec((v_pad, d_pad), lambda i: (0, 0)),
            ],
            out_specs=pl.BlockSpec((tpb, d_pad), lambda i: (i, 0)),
        ),
        compiler_params=pltpu.CompilerParams(
            # Independent output blocks -> shard across both TCs on v7x.
            dimension_semantics=("parallel",),
        ),
    )(ids_blk, table_p)

    return out_pad[:num_tokens, :d_model].reshape(b, s, d_model)


if __name__ == "__main__":
    vocab_size = 64
    d_model = 32
    batch, seq = 2, 8

    key = jax.random.PRNGKey(0)
    k_table, k_ids = jax.random.split(key)

    # Deterministic parameter init (nn.Embedding default: N(0, 1)).
    table = jax.random.normal(k_table, (vocab_size, d_model), dtype=jnp.float32)
    ids = jax.random.randint(k_ids, (batch, seq), 0, vocab_size, dtype=jnp.int32)

    out = embedding_forward(ids, table)
    out = jax.block_until_ready(out)

    # Reference check against plain JAX gather + scale.
    ref = jnp.take(table, ids, axis=0) * math.sqrt(d_model)
    assert out.shape == (batch, seq, d_model)
    assert jnp.allclose(out, ref, atol=1e-5, rtol=1e-5), (
        float(jnp.max(jnp.abs(out - ref))))

    print("KERNEL_OK")
</pallas_src>

<mosaic_0001>
module attributes {stable_mosaic.version = 11 : i64} {
  func.func @embedding_kernel(%arg0: i32, %arg1: memref<1x16x1xi32, #tpu.memory_space<vmem>>, %arg2: memref<128x128xf32, #tpu.memory_space<vmem>>, %arg3: memref<16x128xf32, #tpu.memory_space<vmem>>) attributes {dimension_semantics = [#tpu.dimension_semantics<parallel>], iteration_bounds = array<i64: 1>, scalar_prefetch = 0 : i64, scratch_operands = 0 : i64, tpu.core_type = #tpu.core_type<tc>, window_params = [{transform_indices = @transform_0, window_bounds = array<i64: 1, 16, 1>}, {pipeline_mode = #tpu.pipeline_mode<synchronous>, transform_indices = @transform_1, window_bounds = array<i64: 128, 128>}, {transform_indices = @transform_2, window_bounds = array<i64: 16, 128>}]} {
    %c0 = arith.constant 0 : index
    %c0_0 = arith.constant 0 : index
    %c0_1 = arith.constant 0 : index
    %0 = vector.load %arg1[%c0, %c0_0, %c0_1] : memref<1x16x1xi32, #tpu.memory_space<vmem>>, vector<1x16x1xi32>
    %1 = vector.shape_cast %0 : vector<1x16x1xi32> to vector<16x1xi32>
    %c0_i32 = arith.constant 0 : i32
    %c63_i32 = arith.constant 63 : i32
    %2 = vector.broadcast %c0_i32 : i32 to vector<16x1xi32>
    %3 = arith.maxsi %2, %1 : vector<16x1xi32>
    %4 = vector.broadcast %c63_i32 : i32 to vector<16x1xi32>
    %5 = arith.minsi %4, %3 : vector<16x1xi32>
    %6 = tpu.iota {dimensions = array<i32: 1>} : vector<16x128xi32>
    %7 = vector.broadcast %5 : vector<16x1xi32> to vector<16x128xi32>
    %8 = arith.cmpi eq, %7, %6 : vector<16x128xi32>
    %9 = arith.extui %8 : vector<16x128xi1> to vector<16x128xi32>
    %10 = arith.sitofp %9 : vector<16x128xi32> to vector<16x128xf32>
    %c0_2 = arith.constant 0 : index
    %c0_3 = arith.constant 0 : index
    %11 = vector.load %arg2[%c0_2, %c0_3] : memref<128x128xf32, #tpu.memory_space<vmem>>, vector<128x128xf32>
    %cst = arith.constant dense<0.000000e+00> : vector<16x128xf32>
    %12 = tpu.matmul %10, %11, %cst {dimension_numbers = #tpu.dot_dimension_numbers<[1], [0], [0], [1], [0, 0, 1, 1], [], []>, precision = #tpu.contract_precision<fp32>} : vector<16x128xf32>, vector<128x128xf32>, vector<16x128xf32> -> vector<16x128xf32>
    %cst_4 = arith.constant 5.65685415 : f32
    %13 = vector.broadcast %cst_4 : f32 to vector<16x128xf32>
    %14 = arith.mulf %12, %13 : vector<16x128xf32>
    %c0_5 = arith.constant 0 : index
    %c0_6 = arith.constant 0 : index
    %15 = vector.load %arg3[%c0_5, %c0_6] : memref<16x128xf32, #tpu.memory_space<vmem>>, vector<16x128xf32>
    tpu.vector_store %arg3[%c0_5, %c0_6], %14 {strides = array<i32>} : memref<16x128xf32, #tpu.memory_space<vmem>>, vector<16x128xf32>,
    return
  }
  func.func @transform_0(%arg0: i32) -> (i32, i32, i32) {
    %c0_i32 = arith.constant 0 : i32
    %c0_i32_0 = arith.constant 0 : i32
    %c0_i32_1 = arith.constant 0 : i32
    return %arg0, %c0_i32, %c0_i32_0 : i32, i32, i32
  }
  func.func @transform_1(%arg0: i32) -> (i32, i32) {
    %c0_i32 = arith.constant 0 : i32
    %c0_i32_0 = arith.constant 0 : i32
    %c0_i32_1 = arith.constant 0 : i32
    return %c0_i32, %c0_i32_0 : i32, i32
  }
  func.func @transform_2(%arg0: i32) -> (i32, i32) {
    %c0_i32 = arith.constant 0 : i32
    %c0_i32_0 = arith.constant 0 : i32
    return %arg0, %c0_i32 : i32, i32
  }
}

</mosaic_0001>

<llo_original>
// kernel: tpu_custom_call.1
$region0: #{tpu_custom_call.1}
  #allocation0 [shape = 'u32[]', space=smem, size = 0x4, offset = 0x4, fixed_abs, tag = 'smem constant byte address 0x4 - core index']
  #allocation1 [shape = 'u32[144,128]{1,0:T(1,128)}', space=vmem, size = 0x12000, scoped, tag = 'internal scratch']
  %s0 = inlined_call_operand.vmem [shape: s32[1,16,1], index: 0, kind: input, shape index: {}]
  %s1 = inlined_call_operand.hbm [shape: f32[128,128], index: 1, kind: input, shape index: {}]
  %s2 = inlined_call_operand.hbm [shape: f32[16,128], index: 2, kind: output, shape index: {}]
  %s3 = sld [smem:[#allocation0]]
  $region22: #{tpu_custom_call.1} parent=0
    _
  %s5 = ssub.s32 1, %s3
  %s6 = scalar_select 0, %s5, %s3
  $region1: #{tpu_custom_call.1} parent=0
    #allocation2 [shape = 'u8[65536]{0}', space=vmem, size = 0x10000, scoped, tag = 'input window, operand 1, single buffered']
    #allocation3 [shape = 's32[1]{0}', space=sflag, size = 0x4, scoped, tag = 'scoped memory for tpu_custom_call.1']
    #allocation4 [shape = 's32[1]{0}', space=sflag, size = 0x4, scoped, tag = 'scoped memory for tpu_custom_call.1']
    #allocation5 [shape = 'u8[8192]{0}', space=vmem, size = 0x2000, scoped, tag = 'output window, operand 0, single buffered']
    %7 = vsyncpa [#allocation3], 0
    %8 = vsyncpa [#allocation4], 0
    // Predicated region
    $region2: #{tpu_custom_call.1} parent=1 // pred_check
      _
    $region3: #{tpu_custom_call.1} parent=1 // pred_check_branch
      %10 = sbr.rel (0) target = $region5
    $region4: #{tpu_custom_call.1} parent=1 // pred_region
      _
    $region5: #{tpu_custom_call.1} parent=1 // pred_fallthru
      _
    // Predicated region
    $region6: #{tpu_custom_call.1} parent=1 // pred_check
      _
    $region7: #{tpu_custom_call.1} parent=1 // pred_check_branch
      %12 = sbr.rel (0) target = $region9
    $region8: #{tpu_custom_call.1} parent=1 // pred_region
      %s14 = ssub.s32 2048, 2048
      %15 = vsyncadd [#allocation3], %s14
      %s16 = sshll.u32 [#allocation2], 4
      %s17 = int_to_ptr.vmem [resolvable:$true] %s16
      %22 = dma.hbm_to_vmem [thread:$0]  %s1, 2048, %s17, [#allocation3], 128, 128, 8
    $region9: #{tpu_custom_call.1} parent=1 // pred_fallthru
      _
    // Predicated region
    $region10: #{tpu_custom_call.1} parent=1 // pred_check
      _
    $region11: #{tpu_custom_call.1} parent=1 // pred_check_branch
      %24 = sbr.rel (0) target = $region13
    $region12: #{tpu_custom_call.1} parent=1 // pred_region
      %25 = dma.done [#allocation3], 2048
    $region13: #{tpu_custom_call.1} parent=1 // pred_fallthru
      _
    %v26 = vld [vmem:[%s0] sm:$0xff]
    %v27 = vld [vmem:[%s0 + $0x8] sm:$0xff]
    %vm28 = vcmp.gt.s32.totalorder %v26, 0
    %v29 = vsel %vm28, %v26, 0
    %vm30 = vcmp.gt.s32.totalorder %v27, 0
    %v31 = vsel %vm30, %v27, 0
    %vm32 = vcmp.lt.s32.totalorder %v29, 63
    %v33 = vsel %vm32, %v29, 63
    %vm34 = vcmp.lt.s32.totalorder %v31, 63
    %v35 = vsel %vm34, %v31, 63
    %v36 = vlaneseq
    %v37 = vand.u32 %v36, 127
    %38 = vset.pattern.permute.xlu0 0
    %39 = vperm.xlu0 %38, %v33
    %v40 = vpop.permute.xlu0 %39
    %41 = vset.pattern.permute.xlu0 0
    %42 = vperm.xlu0 %41, %v35
    %v43 = vpop.permute.xlu0 %42
    %vm44 = vcmp.eq.s32.totalorder %v40, %v37
    %vm45 = vcmp.eq.s32.totalorder %v43, %v37
    %v46 = vsel %vm44, 1, 0
    %v47 = vsel %vm45, 1, 0
    %v48 = vcvt.s32.f32 %v46
    %v49 = vcvt.s32.f32 %v47
    %v50 = vld [vmem:[#allocation2] sm:$0xff]
    %v51 = vld [vmem:[#allocation2 + $0x8] sm:$0xff]
    %v52 = vld [vmem:[#allocation2 + $0x10] sm:$0xff]
    %v53 = vld [vmem:[#allocation2 + $0x18] sm:$0xff]
    %v54 = vld [vmem:[#allocation2 + $0x20] sm:$0xff]
    %v55 = vld [vmem:[#allocation2 + $0x28] sm:$0xff]
    %v56 = vld [vmem:[#allocation2 + $0x30] sm:$0xff]
    %v57 = vld [vmem:[#allocation2 + $0x38] sm:$0xff]
    %v58 = vld [vmem:[#allocation2 + $0x40] sm:$0xff]
    %v59 = vld [vmem:[#allocation2 + $0x48] sm:$0xff]
    %v60 = vld [vmem:[#allocation2 + $0x50] sm:$0xff]
    %v61 = vld [vmem:[#allocation2 + $0x58] sm:$0xff]
    %v62 = vld [vmem:[#allocation2 + $0x60] sm:$0xff]
    %v63 = vld [vmem:[#allocation2 + $0x68] sm:$0xff]
    %v64 = vld [vmem:[#allocation2 + $0x70] sm:$0xff]
    %v65 = vld [vmem:[#allocation2 + $0x78] sm:$0xff]
    %66 = vmatprep.subr.mxu0 0.0
    %v67 = vand.u32 %v50, 4294901760
    %68 = vmatpush1.msra.mxu0 %v67
    %69 = vmatprep.subr.mxu0 0.0
    %v70 = vand.u32 %v51, 4294901760
    %71 = vmatpush1.msra.mxu0 %v70
    %72 = vmatprep.subr.mxu0 0.0
    %v73 = vand.u32 %v52, 4294901760
    %74 = vmatpush1.msra.mxu0 %v73
    %75 = vmatprep.subr.mxu0 0.0
    %v76 = vand.u32 %v53, 4294901760
    %77 = vmatpush1.msra.mxu0 %v76
    %78 = vmatprep.subr.mxu0 0.0
    %v79 = vand.u32 %v54, 4294901760
    %80 = vmatpush1.msra.mxu0 %v79
    %81 = vmatprep.subr.mxu0 0.0
    %v82 = vand.u32 %v55, 4294901760
    %83 = vmatpush1.msra.mxu0 %v82
    %84 = vmatprep.subr.mxu0 0.0
    %v85 = vand.u32 %v56, 4294901760
    %86 = vmatpush1.msra.mxu0 %v85
    %87 = vmatprep.subr.mxu0 0.0
    %v88 = vand.u32 %v57, 4294901760
    %89 = vmatpush1.msra.mxu0 %v88
    %90 = vmatprep.subr.mxu0 0.0
    %v91 = vand.u32 %v58, 4294901760
    %92 = vmatpush1.msra.mxu0 %v91
    %93 = vmatprep.subr.mxu0 0.0
    %v94 = vand.u32 %v59, 4294901760
    %95 = vmatpush1.msra.mxu0 %v94
    %96 = vmatprep.subr.mxu0 0.0
    %v97 = vand.u32 %v60, 4294901760
    %98 = vmatpush1.msra.mxu0 %v97
    %99 = vmatprep.subr.mxu0 0.0
    %v100 = vand.u32 %v61, 4294901760
    %101 = vmatpush1.msra.mxu0 %v100
    %102 = vmatprep.subr.mxu0 0.0
    %v103 = vand.u32 %v62, 4294901760
    %104 = vmatpush1.msra.mxu0 %v103
    %105 = vmatprep.subr.mxu0 0.0
    %v106 = vand.u32 %v63, 4294901760
    %107 = vmatpush1.msra.mxu0 %v106
    %108 = vmatprep.subr.mxu0 0.0
    %v109 = vand.u32 %v64, 4294901760
    %110 = vmatpush1.msra.mxu0 %v109
    %111 = vmatprep.subr.mxu0 0.0
    %v112 = vand.u32 %v65, 4294901760
    %113 = vmatpush1.msra.mxu0 %v112
    %114 = vmatprep.subr.mxu0 0.0
    %115 = vmatpush1.msra.mxu0 0.0
    %116 = vmatprep.subr.mxu0 0.0
    %117 = vmatpush1.msra.mxu0 0.0
    %118 = vmatprep.subr.mxu0 0.0
    %119 = vmatpush1.msra.mxu0 0.0
    %120 = vmatprep.subr.mxu0 0.0
    %121 = vmatpush1.msra.mxu0 0.0
    %122 = vmatprep.subr.mxu0 0.0
    %123 = vmatpush1.msra.mxu0 0.0
    %124 = vmatprep.subr.mxu0 0.0
    %125 = vmatpush1.msra.mxu0 0.0
    %126 = vmatprep.subr.mxu0 0.0
    %127 = vmatpush1.msra.mxu0 0.0
    %128 = vmatprep.subr.mxu0 0.0
    %129 = vmatpush1.msra.mxu0 0.0
    %130 = vmatprep.subr.mxu0 0.0
    %131 = vmatpush1.msra.mxu0 0.0
    %132 = vmatprep.subr.mxu0 0.0
    %133 = vmatpush1.msra.mxu0 0.0
    %134 = vmatprep.subr.mxu0 0.0
    %135 = vmatpush1.msra.mxu0 0.0
    %136 = vmatprep.subr.mxu0 0.0
    %137 = vmatpush1.msra.mxu0 0.0
    %138 = vmatprep.subr.mxu0 0.0
    %139 = vmatpush1.msra.mxu0 0.0
    %140 = vmatprep.subr.mxu0 0.0
    %141 = vmatpush1.msra.mxu0 0.0
    %142 = vmatprep.subr.mxu0 0.0
    %143 = vmatpush1.msra.mxu0 0.0
    %144 = vmatprep.subr.mxu0 0.0
    %145 = vmatpush1.msra.mxu0 0.0
    %146 = vmatprep.mubr.f32.mxu0 0.0
    %v147 = vand.u32 %v48, 4294901760
    %v148 = vsub.f32 %v48, %v147
    %v149 = vand.u32 %v148, 4294901760
    %v150 = vsub.f32 %v148, %v149
    %v151 = vand.u32 %v150, 4294901760
    %152 = vmatmul.mubr.f32.gmra.mrb[0].mxu0 %v151
    %v153 = vpop.f32.mrb[0].mxu0
    %v154 = vadd.f32 0.0, %v153
    %v155 = vpop.f32.mrb[0].mxu0
    %156 = vmatprep.mubr.f32.mxu0 0.0
    %v157 = vand.u32 %v49, 4294901760
    %v158 = vsub.f32 %v49, %v157
    %v159 = vand.u32 %v158, 4294901760
    %v160 = vsub.f32 %v158, %v159
    %v161 = vand.u32 %v160, 4294901760
    %162 = vmatmul.mubr.f32.gmra.mrb[0].mxu0 %v161
    %v163 = vpop.f32.mrb[0].mxu0
    %v164 = vadd.f32 0.0, %v163
    %v165 = vpop.f32.mrb[0].mxu0
    %166 = vdwg.mxu0
    %167 = vmatprep.subr.mxu0 0.0
    %v168 = vand.u32 %v50, 4294901760
    %v169 = vsub.f32 %v50, %v168
    %v170 = vand.u32 %v169, 4294901760
    %v171 = vsub.f32 %v169, %v170
    %v172 = vand.u32 %v171, 4294901760
    %173 = vmatpush1.msra.mxu0 %v172
    %174 = vmatprep.subr.mxu0 0.0
    %v175 = vand.u32 %v51, 4294901760
    %v176 = vsub.f32 %v51, %v175
    %v177 = vand.u32 %v176, 4294901760
    %v178 = vsub.f32 %v176, %v177
    %v179 = vand.u32 %v178, 4294901760
    %180 = vmatpush1.msra.mxu0 %v179
    %181 = vmatprep.subr.mxu0 0.0
    %v182 = vand.u32 %v52, 4294901760
    %v183 = vsub.f32 %v52, %v182
    %v184 = vand.u32 %v183, 4294901760
    %v185 = vsub.f32 %v183, %v184
    %v186 = vand.u32 %v185, 4294901760
    %187 = vmatpush1.msra.mxu0 %v186
    %188 = vmatprep.subr.mxu0 0.0
    %v189 = vand.u32 %v53, 4294901760
    %v190 = vsub.f32 %v53, %v189
    %v191 = vand.u32 %v190, 4294901760
    %v192 = vsub.f32 %v190, %v191
    %v193 = vand.u32 %v192, 4294901760
    %194 = vmatpush1.msra.mxu0 %v193
    %195 = vmatprep.subr.mxu0 0.0
    %v196 = vand.u32 %v54, 4294901760
    %v197 = vsub.f32 %v54, %v196
    %v198 = vand.u32 %v197, 4294901760
    %v199 = vsub.f32 %v197, %v198
    %v200 = vand.u32 %v199, 4294901760
    %201 = vmatpush1.msra.mxu0 %v200
    %202 = vmatprep.subr.mxu0 0.0
    %v203 = vand.u32 %v55, 4294901760
    %v204 = vsub.f32 %v55, %v203
    %v205 = vand.u32 %v204, 4294901760
    %v206 = vsub.f32 %v204, %v205
    %v207 = vand.u32 %v206, 4294901760
    %208 = vmatpush1.msra.mxu0 %v207
    %209 = vmatprep.subr.mxu0 0.0
    %v210 = vand.u32 %v56, 4294901760
    %v211 = vsub.f32 %v56, %v210
    %v212 = vand.u32 %v211, 4294901760
    %v213 = vsub.f32 %v211, %v212
    %v214 = vand.u32 %v213, 4294901760
    %215 = vmatpush1.msra.mxu0 %v214
    %216 = vmatprep.subr.mxu0 0.0
    %v217 = vand.u32 %v57, 4294901760
    %v218 = vsub.f32 %v57, %v217
    %v219 = vand.u32 %v218, 4294901760
    %v220 = vsub.f32 %v218, %v219
    %v221 = vand.u32 %v220, 4294901760
    %222 = vmatpush1.msra.mxu0 %v221
    %223 = vmatprep.subr.mxu0 0.0
    %v224 = vand.u32 %v58, 4294901760
    %v225 = vsub.f32 %v58, %v224
    %v226 = vand.u32 %v225, 4294901760
    %v227 = vsub.f32 %v225, %v226
    %v228 = vand.u32 %v227, 4294901760
    %229 = vmatpush1.msra.mxu0 %v228
    %230 = vmatprep.subr.mxu0 0.0
    %v231 = vand.u32 %v59, 4294901760
    %v232 = vsub.f32 %v59, %v231
    %v233 = vand.u32 %v232, 4294901760
    %v234 = vsub.f32 %v232, %v233
    %v235 = vand.u32 %v234, 4294901760
    %236 = vmatpush1.msra.mxu0 %v235
    %237 = vmatprep.subr.mxu0 0.0
    %v238 = vand.u32 %v60, 4294901760
    %v239 = vsub.f32 %v60, %v238
    %v240 = vand.u32 %v239, 4294901760
    %v241 = vsub.f32 %v239, %v240
    %v242 = vand.u32 %v241, 4294901760
    %243 = vmatpush1.msra.mxu0 %v242
    %244 = vmatprep.subr.mxu0 0.0
    %v245 = vand.u32 %v61, 4294901760
    %v246 = vsub.f32 %v61, %v245
    %v247 = vand.u32 %v246, 4294901760
    %v248 = vsub.f32 %v246, %v247
    %v249 = vand.u32 %v248, 4294901760
    %250 = vmatpush1.msra.mxu0 %v249
    %251 = vmatprep.subr.mxu0 0.0
    %v252 = vand.u32 %v62, 4294901760
    %v253 = vsub.f32 %v62, %v252
    %v254 = vand.u32 %v253, 4294901760
    %v255 = vsub.f32 %v253, %v254
    %v256 = vand.u32 %v255, 4294901760
    %257 = vmatpush1.msra.mxu0 %v256
    %258 = vmatprep.subr.mxu0 0.0
    %v259 = vand.u32 %v63, 4294901760
    %v260 = vsub.f32 %v63, %v259
    %v261 = vand.u32 %v260, 4294901760
    %v262 = vsub.f32 %v260, %v261
    %v263 = vand.u32 %v262, 4294901760
    %264 = vmatpush1.msra.mxu0 %v263
    %265 = vmatprep.subr.mxu0 0.0
    %v266 = vand.u32 %v64, 4294901760
    %v267 = vsub.f32 %v64, %v266
    %v268 = vand.u32 %v267, 4294901760
    %v269 = vsub.f32 %v267, %v268
    %v270 = vand.u32 %v269, 4294901760
    %271 = vmatpush1.msra.mxu0 %v270
    %272 = vmatprep.subr.mxu0 0.0
    %v273 = vand.u32 %v65, 4294901760
    %v274 = vsub.f32 %v65, %v273
    %v275 = vand.u32 %v274, 4294901760
    %v276 = vsub.f32 %v274, %v275
    %v277 = vand.u32 %v276, 4294901760
    %278 = vmatpush1.msra.mxu0 %v277
    %279 = vmatprep.subr.mxu0 0.0
    %280 = vmatpush1.msra.mxu0 0.0
    %281 = vmatprep.subr.mxu0 0.0
    %282 = vmatpush1.msra.mxu0 0.0
    %283 = vmatprep.subr.mxu0 0.0
    %284 = vmatpush1.msra.mxu0 0.0
    %285 = vmatprep.subr.mxu0 0.0
    %286 = vmatpush1.msra.mxu0 0.0
    %287 = vmatprep.subr.mxu0 0.0
    %288 = vmatpush1.msra.mxu0 0.0
    %289 = vmatprep.subr.mxu0 0.0
    %290 = vmatpush1.msra.mxu0 0.0
    %291 = vmatprep.subr.mxu0 0.0
    %292 = vmatpush1.msra.mxu0 0.0
    %293 = vmatprep.subr.mxu0 0.0
    %294 = vmatpush1.msra.mxu0 0.0
    %295 = vmatprep.subr.mxu0 0.0
    %296 = vmatpush1.msra.mxu0 0.0
    %297 = vmatprep.subr.mxu0 0.0
    %298 = vmatpush1.msra.mxu0 0.0
    %299 = vmatprep.subr.mxu0 0.0
    %300 = vmatpush1.msra.mxu0 0.0
    %301 = vmatprep.subr.mxu0 0.0
    %302 = vmatpush1.msra.mxu0 0.0
    %303 = vmatprep.subr.mxu0 0.0
    %304 = vmatpush1.msra.mxu0 0.0
    %305 = vmatprep.subr.mxu0 0.0
    %306 = vmatpush1.msra.mxu0 0.0
    %307 = vmatprep.subr.mxu0 0.0
    %308 = vmatpush1.msra.mxu0 0.0
    %309 = vmatprep.subr.mxu0 0.0
    %310 = vmatpush1.msra.mxu0 0.0
    %311 = vmatprep.mubr.f32.mxu0 0.0
    %v312 = vand.u32 %v48, 4294901760
    %313 = vmatmul.mubr.f32.gmra.mrb[0].mxu0 %v312
    %v314 = vpop.f32.mrb[0].mxu0
    %v315 = vadd.f32 %v154, %v314
    %v316 = vpop.f32.mrb[0].mxu0
    %317 = vmatprep.mubr.f32.mxu0 0.0
    %v318 = vand.u32 %v49, 4294901760
    %319 = vmatmul.mubr.f32.gmra.mrb[0].mxu0 %v318
    %v320 = vpop.f32.mrb[0].mxu0
    %v321 = vadd.f32 %v164, %v320
    %v322 = vpop.f32.mrb[0].mxu0
    %323 = vdwg.mxu0
    %324 = vmatprep.subr.mxu0 0.0
    %v325 = vand.u32 %v50, 4294901760
    %v326 = vsub.f32 %v50, %v325
    %327 = vmatpush1.msra.mxu0 %v326
    %328 = vmatprep.subr.mxu0 0.0
    %v329 = vand.u32 %v51, 4294901760
    %v330 = vsub.f32 %v51, %v329
    %331 = vmatpush1.msra.mxu0 %v330
    %332 = vmatprep.subr.mxu0 0.0
    %v333 = vand.u32 %v52, 4294901760
    %v334 = vsub.f32 %v52, %v333
    %335 = vmatpush1.msra.mxu0 %v334
    %336 = vmatprep.subr.mxu0 0.0
    %v337 = vand.u32 %v53, 4294901760
    %v338 = vsub.f32 %v53, %v337
    %339 = vmatpush1.msra.mxu0 %v338
    %340 = vmatprep.subr.mxu0 0.0
    %v341 = vand.u32 %v54, 4294901760
    %v342 = vsub.f32 %v54, %v341
    %343 = vmatpush1.msra.mxu0 %v342
    %344 = vmatprep.subr.mxu0 0.0
    %v345 = vand.u32 %v55, 4294901760
    %v346 = vsub.f32 %v55, %v345
    %347 = vmatpush1.msra.mxu0 %v346
    %348 = vmatprep.subr.mxu0 0.0
    %v349 = vand.u32 %v56, 4294901760
    %v350 = vsub.f32 %v56, %v349
    %351 = vmatpush1.msra.mxu0 %v350
    %352 = vmatprep.subr.mxu0 0.0
    %v353 = vand.u32 %v57, 4294901760
    %v354 = vsub.f32 %v57, %v353
    %355 = vmatpush1.msra.mxu0 %v354
    %356 = vmatprep.subr.mxu0 0.0
    %v357 = vand.u32 %v58, 4294901760
    %v358 = vsub.f32 %v58, %v357
    %359 = vmatpush1.msra.mxu0 %v358
    %360 = vmatprep.subr.mxu0 0.0
    %v361 = vand.u32 %v59, 4294901760
    %v362 = vsub.f32 %v59, %v361
    %363 = vmatpush1.msra.mxu0 %v362
    %364 = vmatprep.subr.mxu0 0.0
    %v365 = vand.u32 %v60, 4294901760
    %v366 = vsub.f32 %v60, %v365
    %367 = vmatpush1.msra.mxu0 %v366
    %368 = vmatprep.subr.mxu0 0.0
    %v369 = vand.u32 %v61, 4294901760
    %v370 = vsub.f32 %v61, %v369
    %371 = vmatpush1.msra.mxu0 %v370
    %372 = vmatprep.subr.mxu0 0.0
    %v373 = vand.u32 %v62, 4294901760
    %v374 = vsub.f32 %v62, %v373
    %375 = vmatpush1.msra.mxu0 %v374
    %376 = vmatprep.subr.mxu0 0.0
    %v377 = vand.u32 %v63, 4294901760
    %v378 = vsub.f32 %v63, %v377
    %379 = vmatpush1.msra.mxu0 %v378
    %380 = vmatprep.subr.mxu0 0.0
    %v381 = vand.u32 %v64, 4294901760
    %v382 = vsub.f32 %v64, %v381
    %383 = vmatpush1.msra.mxu0 %v382
    %384 = vmatprep.subr.mxu0 0.0
    %v385 = vand.u32 %v65, 4294901760
    %v386 = vsub.f32 %v65, %v385
    %387 = vmatpush1.msra.mxu0 %v386
    %388 = vmatprep.subr.mxu0 0.0
    %389 = vmatpush1.msra.mxu0 0.0
    %390 = vmatprep.subr.mxu0 0.0
    %391 = vmatpush1.msra.mxu0 0.0
    %392 = vmatprep.subr.mxu0 0.0
    %393 = vmatpush1.msra.mxu0 0.0
    %394 = vmatprep.subr.mxu0 0.0
    %395 = vmatpush1.msra.mxu0 0.0
    %396 = vmatprep.subr.mxu0 0.0
    %397 = vmatpush1.msra.mxu0 0.0
    %398 = vmatprep.subr.mxu0 0.0
    %399 = vmatpush1.msra.mxu0 0.0
    %400 = vmatprep.subr.mxu0 0.0
    %401 = vmatpush1.msra.mxu0 0.0
    %402 = vmatprep.subr.mxu0 0.0
    %403 = vmatpush1.msra.mxu0 0.0
    %404 = vmatprep.subr.mxu0 0.0
    %405 = vmatpush1.msra.mxu0 0.0
    %406 = vmatprep.subr.mxu0 0.0
    %407 = vmatpush1.msra.mxu0 0.0
    %408 = vmatprep.subr.mxu0 0.0
    %409 = vmatpush1.msra.mxu0 0.0
    %410 = vmatprep.subr.mxu0 0.0
    %411 = vmatpush1.msra.mxu0 0.0
    %412 = vmatprep.subr.mxu0 0.0
    %413 = vmatpush1.msra.mxu0 0.0
    %414 = vmatprep.subr.mxu0 0.0
    %415 = vmatpush1.msra.mxu0 0.0
    %416 = vmatprep.subr.mxu0 0.0
    %417 = vmatpush1.msra.mxu0 0.0
    %418 = vmatprep.subr.mxu0 0.0
    %419 = vmatpush1.msra.mxu0 0.0
    %420 = vmatprep.mubr.f32.mxu0 0.0
    %v421 = vand.u32 %v48, 4294901760
    %v422 = vsub.f32 %v48, %v421
    %423 = vmatmul.mubr.f32.gmra.mrb[0].mxu0 %v422
    %v424 = vpop.f32.mrb[0].mxu0
    %v425 = vadd.f32 %v315, %v424
    %v426 = vpop.f32.mrb[0].mxu0
    %427 = vmatprep.mubr.f32.mxu0 0.0
    %v428 = vand.u32 %v49, 4294901760
    %v429 = vsub.f32 %v49, %v428
    %430 = vmatmul.mubr.f32.gmra.mrb[0].mxu0 %v429
    %v431 = vpop.f32.mrb[0].mxu0
    %v432 = vadd.f32 %v321, %v431
    %v433 = vpop.f32.mrb[0].mxu0
    %434 = vdwg.mxu0
    %435 = vmatprep.subr.mxu0 0.0
    %v436 = vand.u32 %v50, 4294901760
    %437 = vmatpush1.msra.mxu0 %v436
    %438 = vmatprep.subr.mxu0 0.0
    %v439 = vand.u32 %v51, 4294901760
    %440 = vmatpush1.msra.mxu0 %v439
    %441 = vmatprep.subr.mxu0 0.0
    %v442 = vand.u32 %v52, 4294901760
    %443 = vmatpush1.msra.mxu0 %v442
    %444 = vmatprep.subr.mxu0 0.0
    %v445 = vand.u32 %v53, 4294901760
    %446 = vmatpush1.msra.mxu0 %v445
    %447 = vmatprep.subr.mxu0 0.0
    %v448 = vand.u32 %v54, 4294901760
    %449 = vmatpush1.msra.mxu0 %v448
    %450 = vmatprep.subr.mxu0 0.0
    %v451 = vand.u32 %v55, 4294901760
    %452 = vmatpush1.msra.mxu0 %v451
    %453 = vmatprep.subr.mxu0 0.0
    %v454 = vand.u32 %v56, 4294901760
    %455 = vmatpush1.msra.mxu0 %v454
    %456 = vmatprep.subr.mxu0 0.0
    %v457 = vand.u32 %v57, 4294901760
    %458 = vmatpush1.msra.mxu0 %v457
    %459 = vmatprep.subr.mxu0 0.0
    %v460 = vand.u32 %v58, 4294901760
    %461 = vmatpush1.msra.mxu0 %v460
    %462 = vmatprep.subr.mxu0 0.0
    %v463 = vand.u32 %v59, 4294901760
    %464 = vmatpush1.msra.mxu0 %v463
    %465 = vmatprep.subr.mxu0 0.0
    %v466 = vand.u32 %v60, 4294901760
    %467 = vmatpush1.msra.mxu0 %v466
    %468 = vmatprep.subr.mxu0 0.0
    %v469 = vand.u32 %v61, 4294901760
    %470 = vmatpush1.msra.mxu0 %v469
    %471 = vmatprep.subr.mxu0 0.0
    %v472 = vand.u32 %v62, 4294901760
    %473 = vmatpush1.msra.mxu0 %v472
    %474 = vmatprep.subr.mxu0 0.0
    %v475 = vand.u32 %v63, 4294901760
    %476 = vmatpush1.msra.mxu0 %v475
    %477 = vmatprep.subr.mxu0 0.0
    %v478 = vand.u32 %v64, 4294901760
    %479 = vmatpush1.msra.mxu0 %v478
    %480 = vmatprep.subr.mxu0 0.0
    %v481 = vand.u32 %v65, 4294901760
    %482 = vmatpush1.msra.mxu0 %v481
    %483 = vmatprep.subr.mxu0 0.0
    %484 = vmatpush1.msra.mxu0 0.0
    %485 = vmatprep.subr.mxu0 0.0
    %486 = vmatpush1.msra.mxu0 0.0
    %487 = vmatprep.subr.mxu0 0.0
    %488 = vmatpush1.msra.mxu0 0.0
    %489 = vmatprep.subr.mxu0 0.0
    %490 = vmatpush1.msra.mxu0 0.0
    %491 = vmatprep.subr.mxu0 0.0
    %492 = vmatpush1.msra.mxu0 0.0
    %493 = vmatprep.subr.mxu0 0.0
    %494 = vmatpush1.msra.mxu0 0.0
    %495 = vmatprep.subr.mxu0 0.0
    %496 = vmatpush1.msra.mxu0 0.0
    %497 = vmatprep.subr.mxu0 0.0
    %498 = vmatpush1.msra.mxu0 0.0
    %499 = vmatprep.subr.mxu0 0.0
    %500 = vmatpush1.msra.mxu0 0.0
    %501 = vmatprep.subr.mxu0 0.0
    %502 = vmatpush1.msra.mxu0 0.0
    %503 = vmatprep.subr.mxu0 0.0
    %504 = vmatpush1.msra.mxu0 0.0
    %505 = vmatprep.subr.mxu0 0.0
    %506 = vmatpush1.msra.mxu0 0.0
    %507 = vmatprep.subr.mxu0 0.0
    %508 = vmatpush1.msra.mxu0 0.0
    %509 = vmatprep.subr.mxu0 0.0
    %510 = vmatpush1.msra.mxu0 0.0
    %511 = vmatprep.subr.mxu0 0.0
    %512 = vmatpush1.msra.mxu0 0.0
    %513 = vmatprep.subr.mxu0 0.0
    %514 = vmatpush1.msra.mxu0 0.0
    %515 = vmatprep.mubr.f32.mxu0 0.0
    %v516 = vand.u32 %v48, 4294901760
    %v517 = vsub.f32 %v48, %v516
    %v518 = vand.u32 %v517, 4294901760
    %519 = vmatmul.mubr.f32.gmra.mrb[0].mxu0 %v518
    %v520 = vpop.f32.mrb[0].mxu0
    %v521 = vadd.f32 %v425, %v520
    %v522 = vpop.f32.mrb[0].mxu0
    %523 = vmatprep.mubr.f32.mxu0 0.0
    %v524 = vand.u32 %v49, 4294901760
    %v525 = vsub.f32 %v49, %v524
    %v526 = vand.u32 %v525, 4294901760
    %527 = vmatmul.mubr.f32.gmra.mrb[0].mxu0 %v526
    %v528 = vpop.f32.mrb[0].mxu0
    %v529 = vadd.f32 %v432, %v528
    %v530 = vpop.f32.mrb[0].mxu0
    %531 = vdwg.mxu0
    %532 = vmatprep.subr.mxu0 0.0
    %v533 = vand.u32 %v50, 4294901760
    %v534 = vsub.f32 %v50, %v533
    %v535 = vand.u32 %v534, 4294901760
    %536 = vmatpush1.msra.mxu0 %v535
    %537 = vmatprep.subr.mxu0 0.0
    %v538 = vand.u32 %v51, 4294901760
    %v539 = vsub.f32 %v51, %v538
    %v540 = vand.u32 %v539, 4294901760
    %541 = vmatpush1.msra.mxu0 %v540
    %542 = vmatprep.subr.mxu0 0.0
    %v543 = vand.u32 %v52, 4294901760
    %v544 = vsub.f32 %v52, %v543
    %v545 = vand.u32 %v544, 4294901760
    %546 = vmatpush1.msra.mxu0 %v545
    %547 = vmatprep.subr.mxu0 0.0
    %v548 = vand.u32 %v53, 4294901760
    %v549 = vsub.f32 %v53, %v548
    %v550 = vand.u32 %v549, 4294901760
    %551 = vmatpush1.msra.mxu0 %v550
    %552 = vmatprep.subr.mxu0 0.0
    %v553 = vand.u32 %v54, 4294901760
    %v554 = vsub.f32 %v54, %v553
    %v555 = vand.u32 %v554, 4294901760
    %556 = vmatpush1.msra.mxu0 %v555
    %557 = vmatprep.subr.mxu0 0.0
    %v558 = vand.u32 %v55, 4294901760
    %v559 = vsub.f32 %v55, %v558
    %v560 = vand.u32 %v559, 4294901760
    %561 = vmatpush1.msra.mxu0 %v560
    %562 = vmatprep.subr.mxu0 0.0
    %v563 = vand.u32 %v56, 4294901760
    %v564 = vsub.f32 %v56, %v563
    %v565 = vand.u32 %v564, 4294901760
    %566 = vmatpush1.msra.mxu0 %v565
    %567 = vmatprep.subr.mxu0 0.0
    %v568 = vand.u32 %v57, 4294901760
    %v569 = vsub.f32 %v57, %v568
    %v570 = vand.u32 %v569, 4294901760
    %571 = vmatpush1.msra.mxu0 %v570
    %572 = vmatprep.subr.mxu0 0.0
    %v573 = vand.u32 %v58, 4294901760
    %v574 = vsub.f32 %v58, %v573
    %v575 = vand.u32 %v574, 4294901760
    %576 = vmatpush1.msra.mxu0 %v575
    %577 = vmatprep.subr.mxu0 0.0
    %v578 = vand.u32 %v59, 4294901760
    %v579 = vsub.f32 %v59, %v578
    %v580 = vand.u32 %v579, 4294901760
    %581 = vmatpush1.msra.mxu0 %v580
    %582 = vmatprep.subr.mxu0 0.0
    %v583 = vand.u32 %v60, 4294901760
    %v584 = vsub.f32 %v60, %v583
    %v585 = vand.u32 %v584, 4294901760
    %586 = vmatpush1.msra.mxu0 %v585
    %587 = vmatprep.subr.mxu0 0.0
    %v588 = vand.u32 %v61, 4294901760
    %v589 = vsub.f32 %v61, %v588
    %v590 = vand.u32 %v589, 4294901760
    %591 = vmatpush1.msra.mxu0 %v590
    %592 = vmatprep.subr.mxu0 0.0
    %v593 = vand.u32 %v62, 4294901760
    %v594 = vsub.f32 %v62, %v593
    %v595 = vand.u32 %v594, 4294901760
    %596 = vmatpush1.msra.mxu0 %v595
    %597 = vmatprep.subr.mxu0 0.0
    %v598 = vand.u32 %v63, 4294901760
    %v599 = vsub.f32 %v63, %v598
    %v600 = vand.u32 %v599, 4294901760
    %601 = vmatpush1.msra.mxu0 %v600
    %602 = vmatprep.subr.mxu0 0.0
    %v603 = vand.u32 %v64, 4294901760
    %v604 = vsub.f32 %v64, %v603
    %v605 = vand.u32 %v604, 4294901760
    %606 = vmatpush1.msra.mxu0 %v605
    %607 = vmatprep.subr.mxu0 0.0
    %v608 = vand.u32 %v65, 4294901760
    %v609 = vsub.f32 %v65, %v608
    %v610 = vand.u32 %v609, 4294901760
    %611 = vmatpush1.msra.mxu0 %v610
    %612 = vmatprep.subr.mxu0 0.0
    %613 = vmatpush1.msra.mxu0 0.0
    %614 = vmatprep.subr.mxu0 0.0
    %615 = vmatpush1.msra.mxu0 0.0
    %616 = vmatprep.subr.mxu0 0.0
    %617 = vmatpush1.msra.mxu0 0.0
    %618 = vmatprep.subr.mxu0 0.0
    %619 = vmatpush1.msra.mxu0 0.0
    %620 = vmatprep.subr.mxu0 0.0
    %621 = vmatpush1.msra.mxu0 0.0
    %622 = vmatprep.subr.mxu0 0.0
    %623 = vmatpush1.msra.mxu0 0.0
    %624 = vmatprep.subr.mxu0 0.0
    %625 = vmatpush1.msra.mxu0 0.0
    %626 = vmatprep.subr.mxu0 0.0
    %627 = vmatpush1.msra.mxu0 0.0
    %628 = vmatprep.subr.mxu0 0.0
    %629 = vmatpush1.msra.mxu0 0.0
    %630 = vmatprep.subr.mxu0 0.0
    %631 = vmatpush1.msra.mxu0 0.0
    %632 = vmatprep.subr.mxu0 0.0
    %633 = vmatpush1.msra.mxu0 0.0
    %634 = vmatprep.subr.mxu0 0.0
    %635 = vmatpush1.msra.mxu0 0.0
    %636 = vmatprep.subr.mxu0 0.0
    %637 = vmatpush1.msra.mxu0 0.0
    %638 = vmatprep.subr.mxu0 0.0
    %639 = vmatpush1.msra.mxu0 0.0
    %640 = vmatprep.subr.mxu0 0.0
    %641 = vmatpush1.msra.mxu0 0.0
    %642 = vmatprep.subr.mxu0 0.0
    %643 = vmatpush1.msra.mxu0 0.0
    %644 = vmatprep.mubr.f32.mxu0 0.0
    %v645 = vand.u32 %v48, 4294901760
    %646 = vmatmul.mubr.f32.gmra.mrb[0].mxu0 %v645
    %v647 = vpop.f32.mrb[0].mxu0
    %v648 = vadd.f32 %v521, %v647
    %v649 = vpop.f32.mrb[0].mxu0
    %650 = vmatprep.mubr.f32.mxu0 0.0
    %v651 = vand.u32 %v49, 4294901760
    %652 = vmatmul.mubr.f32.gmra.mrb[0].mxu0 %v651
    %v653 = vpop.f32.mrb[0].mxu0
    %v654 = vadd.f32 %v529, %v653
    %v655 = vpop.f32.mrb[0].mxu0
    %656 = vdwg.mxu0
    %657 = vmatprep.subr.mxu0 0.0
    %v658 = vand.u32 %v50, 4294901760
    %659 = vmatpush1.msra.mxu0 %v658
    %660 = vmatprep.subr.mxu0 0.0
    %v661 = vand.u32 %v51, 4294901760
    %662 = vmatpush1.msra.mxu0 %v661
    %663 = vmatprep.subr.mxu0 0.0
    %v664 = vand.u32 %v52, 4294901760
    %665 = vmatpush1.msra.mxu0 %v664
    %666 = vmatprep.subr.mxu0 0.0
    %v667 = vand.u32 %v53, 4294901760
    %668 = vmatpush1.msra.mxu0 %v667
    %669 = vmatprep.subr.mxu0 0.0
    %v670 = vand.u32 %v54, 4294901760
    %671 = vmatpush1.msra.mxu0 %v670
    %672 = vmatprep.subr.mxu0 0.0
    %v673 = vand.u32 %v55, 4294901760
    %674 = vmatpush1.msra.mxu0 %v673
    %675 = vmatprep.subr.mxu0 0.0
    %v676 = vand.u32 %v56, 4294901760
    %677 = vmatpush1.msra.mxu0 %v676
    %678 = vmatprep.subr.mxu0 0.0
    %v679 = vand.u32 %v57, 4294901760
    %680 = vmatpush1.msra.mxu0 %v679
    %681 = vmatprep.subr.mxu0 0.0
    %v682 = vand.u32 %v58, 4294901760
    %683 = vmatpush1.msra.mxu0 %v682
    %684 = vmatprep.subr.mxu0 0.0
    %v685 = vand.u32 %v59, 4294901760
    %686 = vmatpush1.msra.mxu0 %v685
    %687 = vmatprep.subr.mxu0 0.0
    %v688 = vand.u32 %v60, 4294901760
    %689 = vmatpush1.msra.mxu0 %v688
    %690 = vmatprep.subr.mxu0 0.0
    %v691 = vand.u32 %v61, 4294901760
    %692 = vmatpush1.msra.mxu0 %v691
    %693 = vmatprep.subr.mxu0 0.0
    %v694 = vand.u32 %v62, 4294901760
    %695 = vmatpush1.msra.mxu0 %v694
    %696 = vmatprep.subr.mxu0 0.0
    %v697 = vand.u32 %v63, 4294901760
    %698 = vmatpush1.msra.mxu0 %v697
    %699 = vmatprep.subr.mxu0 0.0
    %v700 = vand.u32 %v64, 4294901760
    %701 = vmatpush1.msra.mxu0 %v700
    %702 = vmatprep.subr.mxu0 0.0
    %v703 = vand.u32 %v65, 4294901760
    %704 = vmatpush1.msra.mxu0 %v703
    %705 = vmatprep.subr.mxu0 0.0
    %706 = vmatpush1.msra.mxu0 0.0
    %707 = vmatprep.subr.mxu0 0.0
    %708 = vmatpush1.msra.mxu0 0.0
    %709 = vmatprep.subr.mxu0 0.0
    %710 = vmatpush1.msra.mxu0 0.0
    %711 = vmatprep.subr.mxu0 0.0
    %712 = vmatpush1.msra.mxu0 0.0
    %713 = vmatprep.subr.mxu0 0.0
    %714 = vmatpush1.msra.mxu0 0.0
    %715 = vmatprep.subr.mxu0 0.0
    %716 = vmatpush1.msra.mxu0 0.0
    %717 = vmatprep.subr.mxu0 0.0
    %718 = vmatpush1.msra.mxu0 0.0
    %719 = vmatprep.subr.mxu0 0.0
    %720 = vmatpush1.msra.mxu0 0.0
    %721 = vmatprep.subr.mxu0 0.0
    %722 = vmatpush1.msra.mxu0 0.0
    %723 = vmatprep.subr.mxu0 0.0
    %724 = vmatpush1.msra.mxu0 0.0
    %725 = vmatprep.subr.mxu0 0.0
    %726 = vmatpush1.msra.mxu0 0.0
    %727 = vmatprep.subr.mxu0 0.0
    %728 = vmatpush1.msra.mxu0 0.0
    %729 = vmatprep.subr.mxu0 0.0
    %730 = vmatpush1.msra.mxu0 0.0
    %731 = vmatprep.subr.mxu0 0.0
    %732 = vmatpush1.msra.mxu0 0.0
    %733 = vmatprep.subr.mxu0 0.0
    %734 = vmatpush1.msra.mxu0 0.0
    %735 = vmatprep.subr.mxu0 0.0
    %736 = vmatpush1.msra.mxu0 0.0
    %737 = vmatprep.mubr.f32.mxu0 0.0
    %v738 = vand.u32 %v48, 4294901760
    %739 = vmatmul.mubr.f32.gmra.mrb[0].mxu0 %v738
    %v740 = vpop.f32.mrb[0].mxu0
    %v741 = vadd.f32 %v648, %v740
    %v742 = vpop.f32.mrb[0].mxu0
    %743 = vmatprep.mubr.f32.mxu0 0.0
    %v744 = vand.u32 %v49, 4294901760
    %745 = vmatmul.mubr.f32.gmra.mrb[0].mxu0 %v744
    %v746 = vpop.f32.mrb[0].mxu0
    %v747 = vadd.f32 %v654, %v746
    %v748 = vpop.f32.mrb[0].mxu0
    %749 = vdwg.mxu0
    %v750 = vmul.f32 %v741, 5.656854
    %v751 = vmul.f32 %v747, 5.656854
    %752 = vst [vmem:[#allocation5] sm:$0xff] %v750
    %753 = vst [vmem:[#allocation5 + $0x8] sm:$0xff] %v751
    // Predicated region
    $region14: #{tpu_custom_call.1} parent=1 // pred_check
      _
    $region15: #{tpu_custom_call.1} parent=1 // pred_check_branch
      %755 = sbr.rel (0) target = $region17
    $region16: #{tpu_custom_call.1} parent=1 // pred_region
      %s757 = ssub.s32 256, 256
      %758 = vsyncadd [#allocation4], %s757
      %s759 = sshll.u32 [#allocation5], 4
      %s760 = int_to_ptr.vmem [resolvable:$true] %s759
      %765 = dma.vmem_to_hbm [thread:$0]  %s760, 256, %s2, [#allocation4], 128, 128, 8
    $region17: #{tpu_custom_call.1} parent=1 // pred_fallthru
      _
    // Predicated region
    $region18: #{tpu_custom_call.1} parent=1 // pred_check
      _
    $region19: #{tpu_custom_call.1} parent=1 // pred_check_branch
      %767 = sbr.rel (0) target = $region21
    $region20: #{tpu_custom_call.1} parent=1 // pred_region
      %768 = dma.done [#allocation4], 256
    $region21: #{tpu_custom_call.1} parent=1 // pred_fallthru
      _
    %769 = vsyncpa [#allocation3], 1
    %770 = vsyncpa [#allocation4], 1

</llo_original>
